<compile_context>
chip_gen: v6e
topology: v6e:2x2x1
jax: 0.10.0
libtpu: 0.0.40
codegen_flags: <defaults>
</compile_context>

<pallas_src>
import functools

import jax
import jax.numpy as jnp
from jax.experimental import pallas as pl
from jax.experimental.pallas import tpu as pltpu


def _round_up(n, m):
    return (n + m - 1) // m * m


def _lane_multiple():
    # v6e/v7x MXUs are 2x256x256 -> pad the output N dim to 256 so every MXU
    # pass is full; v5e (and older / unknown) are 128x128 -> 128 suffices.
    try:
        kind = jax.devices()[0].device_kind.lower()
    except Exception:
        return 128
    if any(tag in kind for tag in ("v6", "v7", "trillium")):
        return 256
    return 128


def _vmem_limit_bytes():
    # Generation-aware scoped-VMEM request: ~85% of physical capacity, leaving
    # headroom for compiler-internal scratch (v5e/v6e: 128 MiB, v7x: 64 MiB/TC).
    try:
        cap = int(pltpu.get_tpu_info().vmem_capacity_bytes)
    except Exception:
        cap = 64 * 1024 * 1024  # conservative fallback, valid on every gen
    return max(32 * 1024 * 1024, min(int(cap * 0.85), cap))


def _sublane_multiple(dtype):
    # Sub-32-bit dtypes pack along sublanes: bf16 vreg is [16,128], int8/fp8 [32,128].
    return {4: 8, 2: 16, 1: 32}.get(jnp.dtype(dtype).itemsize, 8)


def _choose_tm(M, tm_request, sub_mult):
    """Largest M tile that: is a multiple of sub_mult, <= tm_request, yields >= 2
    grid steps when M permits (v7x megacore), and divides M when possible (so the
    activation pad / un-pad round-trip through HBM is skipped)."""
    cap = min(_round_up(tm_request, sub_mult), _round_up(M, sub_mult))
    if M >= 2 * sub_mult:
        cap = min(cap, _round_up((M + 1) // 2, sub_mult))
    cap = max(cap, sub_mult)
    for t in range(cap, 0, -sub_mult):
        if M % t == 0:
            return t
    return cap


# --------------------------------------------------------------------------- #
# One-time weight preparation (hoisted out of the per-call forward).
# --------------------------------------------------------------------------- #
def prepare_swiglu_weights(w1, b1, w2, b2, w3, b3, *, th=512,
                           compute_dtype=jnp.bfloat16, lane_mult=None):
    """Fuse + pad the SwiGLU weights into TPU layout.  Call once, reuse.

    Returns (params, meta):
      params = (w12, b12, w3p, b3p)
      meta   = dict(th=..., out_features=...)   (static kwargs for swiglu_fused)

    Layout (NH = Hp // th chunks over the hidden dim):
      w12 : (D, NH*2*th), chunk h = [ W1[:, h*th:(h+1)*th] | W2[:, h*th:(h+1)*th] ]
      b12 : (1, NH*2*th)  analogous, f32
      w3p : (Hp, Op) zero-padded, b3p : (1, Op) f32
    Padded rows/columns are zero, so SiLU(0)*0 = 0 and padded W3 rows contribute 0.
    """
    D, H = w1.shape
    O = w3.shape[1]
    cdt = jnp.dtype(compute_dtype)
    if lane_mult is None:
        lane_mult = _lane_multiple()

    th = _round_up(min(th, _round_up(H, 128)), 128)   # lane-dense hidden chunk
    Hp = _round_up(H, th)
    NH = Hp // th
    Op = _round_up(O, lane_mult)                      # lane/MXU-dense output

    w1p = jnp.zeros((D, Hp), cdt).at[:, :H].set(w1.astype(cdt)).reshape(D, NH, th)
    w2p = jnp.zeros((D, Hp), cdt).at[:, :H].set(w2.astype(cdt)).reshape(D, NH, th)
    w12 = jnp.stack([w1p, w2p], axis=2).reshape(D, NH * 2 * th)

    b1p = jnp.zeros((Hp,), jnp.float32).at[:H].set(b1.astype(jnp.float32)).reshape(NH, th)
    b2p = jnp.zeros((Hp,), jnp.float32).at[:H].set(b2.astype(jnp.float32)).reshape(NH, th)
    b12 = jnp.stack([b1p, b2p], axis=1).reshape(1, NH * 2 * th)

    w3p = jnp.zeros((Hp, Op), cdt).at[:H, :O].set(w3.astype(cdt))
    b3p = jnp.zeros((1, Op), jnp.float32).at[:, :O].set(b3.astype(jnp.float32))

    return (w12, b12, w3p, b3p), dict(th=th, out_features=O)


# --------------------------------------------------------------------------- #
# Kernel
# --------------------------------------------------------------------------- #
def swiglu_kernel(x_ref, w12_ref, b12_ref, w3_ref, b3_ref, o_ref, acc_ref, *, th):
    h = pl.program_id(1)

    @pl.when(h == 0)
    def _init():
        acc_ref[...] = jnp.zeros_like(acc_ref)

    # Fused first stage for this H-chunk: one MXU pass -> [x1_h | x2_h], f32 accumulate.
    x12 = jnp.dot(x_ref[...], w12_ref[...],
                  preferred_element_type=jnp.float32) + b12_ref[...]
    x1 = x12[:, :th]                  # static, lane-aligned split (th % 128 == 0)
    x2 = x12[:, th:]
    # SiLU in f32 (sigmoid -> EUP slot, muls -> VPU); padded H columns stay exactly 0.
    hidden = (x1 * jax.nn.sigmoid(x1)) * x2
    # Partial second matmul over this H-chunk into the resident f32 accumulator.
    acc_ref[...] += jnp.dot(hidden.astype(w3_ref.dtype), w3_ref[...],
                            preferred_element_type=jnp.float32)

    @pl.when(h == pl.num_programs(1) - 1)
    def _finalize():
        # ffn_ln is Identity (subln=False); Dropout(p=0.0) is identity.
        o_ref[...] = (acc_ref[...] + b3_ref[...]).astype(o_ref.dtype)


# --------------------------------------------------------------------------- #
# Forward on pre-fused weights (the hot path)
# --------------------------------------------------------------------------- #
@functools.partial(jax.jit,
                   static_argnames=("th", "out_features", "tm", "out_dtype"))
def swiglu_fused(x, w12, b12, w3p, b3p, *, th, out_features, tm=256,
                 out_dtype=None):
    B, S, D = x.shape
    M = B * S
    O = out_features
    cdt = w12.dtype
    odt = jnp.dtype(out_dtype) if out_dtype is not None else x.dtype

    NH = w12.shape[1] // (2 * th)
    Hp = NH * th
    Op = w3p.shape[1]

    sub_mult = _sublane_multiple(cdt)
    tm_eff = _choose_tm(M, tm, sub_mult)
    Mp = _round_up(M, tm_eff)

    xf = x.reshape(M, D).astype(cdt)
    if Mp != M:
        xf = jnp.pad(xf, ((0, Mp - M), (0, 0)))

    grid = (Mp // tm_eff, NH)

    itm = jnp.dtype(cdt).itemsize
    out_itm = jnp.dtype(odt).itemsize
    cost = pl.CostEstimate(
        flops=2 * Mp * D * (2 * Hp) + 2 * Mp * Hp * Op,
        transcendentals=Mp * Hp,
        bytes_accessed=(Mp * D * itm
                        + (w12.size + w3p.size) * itm
                        + (b12.size + b3p.size) * 4
                        + Mp * Op * out_itm),
    )

    out = pl.pallas_call(
        functools.partial(swiglu_kernel, th=th),
        out_shape=jax.ShapeDtypeStruct((Mp, Op), odt),
        grid_spec=pltpu.PrefetchScalarGridSpec(
            num_scalar_prefetch=0,
            grid=grid,
            in_specs=[
                pl.BlockSpec((tm_eff, D), lambda i, h: (i, 0)),     # x tile (resident over h)
                pl.BlockSpec((D, 2 * th), lambda i, h: (0, h)),     # fused [W1|W2] chunk h
                pl.BlockSpec((1, 2 * th), lambda i, h: (0, h)),     # fused [b1|b2] chunk h
                pl.BlockSpec((th, Op), lambda i, h: (h, 0)),        # W3 K-chunk h
                pl.BlockSpec((1, Op), lambda i, h: (0, 0)),         # b3
            ],
            out_specs=pl.BlockSpec((tm_eff, Op), lambda i, h: (i, 0)),
            scratch_shapes=[pltpu.VMEM((tm_eff, Op), jnp.float32)],  # f32 accumulator
        ),
        compiler_params=pltpu.CompilerParams(
            dimension_semantics=("parallel", "arbitrary"),
            vmem_limit_bytes=_vmem_limit_bytes()),
        cost_estimate=cost,
    )(xf, w12, b12, w3p, b3p)

    if Mp != M or Op != O:
        out = out[:M, :O]
    return out.reshape(B, S, O)


def swiglu(x, w1, b1, w2, b2, w3, b3, *, th=512, tm=256,
           compute_dtype=jnp.bfloat16, out_dtype=None):
    """Convenience wrapper (prepares weights each call).  In production, call
    prepare_swiglu_weights() once and reuse its output with swiglu_fused()."""
    params, meta = prepare_swiglu_weights(
        w1, b1, w2, b2, w3, b3, th=th, compute_dtype=compute_dtype)
    return swiglu_fused(x, *params, tm=tm, out_dtype=out_dtype, **meta)


# --------------------------------------------------------------------------- #
# Reference + tests
# --------------------------------------------------------------------------- #
def swiglu_ref(x, w1, b1, w2, b2, w3, b3):
    x1 = x @ w1 + b1
    x2 = x @ w2 + b2
    hidden = jax.nn.silu(x1) * x2
    return hidden @ w3 + b3


def _make_params(key, D, H, O, dtype=jnp.float32):
    k1, k2, k3, kb1, kb2, kb3 = jax.random.split(key, 6)
    w1 = jax.random.normal(k1, (D, H), dtype) * 0.05
    w2 = jax.random.normal(k2, (D, H), dtype) * 0.05
    w3 = jax.random.normal(k3, (H, O), dtype) * 0.05
    b1 = jax.random.normal(kb1, (H,), dtype) * 0.01
    b2 = jax.random.normal(kb2, (H,), dtype) * 0.01
    b3 = jax.random.normal(kb3, (O,), dtype) * 0.01
    return w1, b1, w2, b2, w3, b3


if __name__ == "__main__":
    key = jax.random.PRNGKey(0)

    # --- test 1: small module-like shapes, f32 compute for a tight check -------
    B, S, D, H, O = 2, 8, 32, 64, 32          # out_features defaults to in_features
    kx, kp = jax.random.split(key)
    x = jax.random.normal(kx, (B, S, D), dtype=jnp.float32)
    params = _make_params(kp, D, H, O)

    out = swiglu(x, *params, compute_dtype=jnp.float32)
    out = jax.block_until_ready(out)
    ref = swiglu_ref(x, *params)
    assert out.shape == (B, S, O)
    assert jnp.allclose(out, ref, atol=1e-4, rtol=1e-4), "mismatch vs reference (test 1)"

    # --- test 2: hoisted weight prep, default bf16 MXU inputs, exercises
    #             M-padding, O-padding, multi-step M grid and multi-step H grid -
    B2, S2, D2, H2, O2 = 2, 260, 64, 384, 96
    kx2, kp2 = jax.random.split(jax.random.PRNGKey(1))
    x2 = jax.random.normal(kx2, (B2, S2, D2), dtype=jnp.float32)
    params2 = _make_params(kp2, D2, H2, O2)

    fused2, meta2 = prepare_swiglu_weights(*params2, th=128)   # prepared ONCE
    out2 = swiglu_fused(x2, *fused2, tm=256, **meta2)
    out2 = jax.block_until_ready(out2)
    ref2 = swiglu_ref(x2, *params2)
    assert out2.shape == (B2, S2, O2)
    assert jnp.allclose(out2, ref2, atol=3e-2, rtol=3e-2), "mismatch vs reference (test 2)"

    print("KERNEL_OK")
</pallas_src>

<mosaic_0001>
module attributes {stable_mosaic.version = 11 : i64} {
  func.func @swiglu_kernel(%arg0: i32, %arg1: i32, %arg2: memref<8x32xf32, #tpu.memory_space<vmem>>, %arg3: memref<32x256xf32, #tpu.memory_space<vmem>>, %arg4: memref<1x256xf32, #tpu.memory_space<vmem>>, %arg5: memref<128x128xf32, #tpu.memory_space<vmem>>, %arg6: memref<1x128xf32, #tpu.memory_space<vmem>>, %arg7: memref<8x128xf32, #tpu.memory_space<vmem>>, %arg8: memref<8x128xf32, #tpu.memory_space<vmem>>) attributes {dimension_semantics = [#tpu.dimension_semantics<parallel>, #tpu.dimension_semantics<arbitrary>], iteration_bounds = array<i64: 2, 1>, scalar_prefetch = 0 : i64, scratch_operands = 1 : i64, tpu.core_type = #tpu.core_type<tc>, window_params = [{transform_indices = @transform_0, window_bounds = array<i64: 8, 32>}, {transform_indices = @transform_1, window_bounds = array<i64: 32, 256>}, {transform_indices = @transform_2, window_bounds = array<i64: 1, 256>}, {transform_indices = @transform_3, window_bounds = array<i64: 128, 128>}, {pipeline_mode = #tpu.pipeline_mode<synchronous>, transform_indices = @transform_4, window_bounds = array<i64: 1, 128>}, {transform_indices = @transform_5, window_bounds = array<i64: 8, 128>}]} {
    %c0_i32 = arith.constant 0 : i32
    %0 = arith.cmpi eq, %arg1, %c0_i32 : i32
    %1 = arith.extui %0 : i1 to i32
    %c0_i32_0 = arith.constant 0 : i32
    %2 = arith.cmpi ne, %1, %c0_i32_0 : i32
    scf.if %2 {
      %cst_16 = arith.constant 0.000000e+00 : f32
      %26 = vector.broadcast %cst_16 : f32 to vector<8x128xf32>
      %c0_17 = arith.constant 0 : index
      %c0_18 = arith.constant 0 : index
      %27 = vector.load %arg8[%c0_17, %c0_18] : memref<8x128xf32, #tpu.memory_space<vmem>>, vector<8x128xf32>
      tpu.vector_store %arg8[%c0_17, %c0_18], %26 {strides = array<i32>} : memref<8x128xf32, #tpu.memory_space<vmem>>, vector<8x128xf32>,
    } else {
    }
    %c0 = arith.constant 0 : index
    %c0_1 = arith.constant 0 : index
    %3 = vector.load %arg2[%c0, %c0_1] : memref<8x32xf32, #tpu.memory_space<vmem>>, vector<8x32xf32>
    %c0_2 = arith.constant 0 : index
    %c0_3 = arith.constant 0 : index
    %4 = vector.load %arg3[%c0_2, %c0_3] : memref<32x256xf32, #tpu.memory_space<vmem>>, vector<32x256xf32>
    %cst = arith.constant dense<0.000000e+00> : vector<8x256xf32>
    %5 = tpu.matmul %3, %4, %cst {dimension_numbers = #tpu.dot_dimension_numbers<[1], [0], [0], [1], [0, 0, 1, 1], [], []>} : vector<8x32xf32>, vector<32x256xf32>, vector<8x256xf32> -> vector<8x256xf32>
    %c0_4 = arith.constant 0 : index
    %c0_5 = arith.constant 0 : index
    %6 = vector.load %arg4[%c0_4, %c0_5] : memref<1x256xf32, #tpu.memory_space<vmem>>, vector<1x256xf32>
    %7 = vector.broadcast %6 : vector<1x256xf32> to vector<8x256xf32>
    %8 = arith.addf %5, %7 : vector<8x256xf32>
    %9 = vector.extract_strided_slice %8 {offsets = [0, 0], sizes = [8, 128], strides = [1, 1]} : vector<8x256xf32> to vector<8x128xf32>
    %10 = vector.extract_strided_slice %8 {offsets = [0, 128], sizes = [8, 128], strides = [1, 1]} : vector<8x256xf32> to vector<8x128xf32>
    %11 = arith.negf %9 : vector<8x128xf32>
    %12 = math.exp %11 : vector<8x128xf32>
    %cst_6 = arith.constant 1.000000e+00 : f32
    %13 = vector.broadcast %cst_6 : f32 to vector<8x128xf32>
    %14 = arith.addf %13, %12 : vector<8x128xf32>
    %15 = arith.divf %13, %14 : vector<8x128xf32>
    %16 = arith.mulf %9, %15 : vector<8x128xf32>
    %17 = arith.mulf %16, %10 : vector<8x128xf32>
    %c0_7 = arith.constant 0 : index
    %c0_8 = arith.constant 0 : index
    %18 = vector.load %arg8[%c0_7, %c0_8] : memref<8x128xf32, #tpu.memory_space<vmem>>, vector<8x128xf32>
    %c0_9 = arith.constant 0 : index
    %c0_10 = arith.constant 0 : index
    %19 = vector.load %arg5[%c0_9, %c0_10] : memref<128x128xf32, #tpu.memory_space<vmem>>, vector<128x128xf32>
    %cst_11 = arith.constant dense<0.000000e+00> : vector<8x128xf32>
    %20 = tpu.matmul %17, %19, %cst_11 {dimension_numbers = #tpu.dot_dimension_numbers<[1], [0], [0], [1], [0, 0, 1, 1], [], []>} : vector<8x128xf32>, vector<128x128xf32>, vector<8x128xf32> -> vector<8x128xf32>
    %21 = arith.addf %18, %20 : vector<8x128xf32>
    %c0_12 = arith.constant 0 : index
    %c0_13 = arith.constant 0 : index
    %22 = vector.load %arg8[%c0_12, %c0_13] : memref<8x128xf32, #tpu.memory_space<vmem>>, vector<8x128xf32>
    tpu.vector_store %arg8[%c0_12, %c0_13], %21 {strides = array<i32>} : memref<8x128xf32, #tpu.memory_space<vmem>>, vector<8x128xf32>,
    %c0_i32_14 = arith.constant 0 : i32
    %23 = arith.cmpi eq, %arg1, %c0_i32_14 : i32
    %24 = arith.extui %23 : i1 to i32
    %c0_i32_15 = arith.constant 0 : i32
    %25 = arith.cmpi ne, %24, %c0_i32_15 : i32
    scf.if %25 {
      %c0_16 = arith.constant 0 : index
      %c0_17 = arith.constant 0 : index
      %26 = vector.load %arg8[%c0_16, %c0_17] : memref<8x128xf32, #tpu.memory_space<vmem>>, vector<8x128xf32>
      %c0_18 = arith.constant 0 : index
      %c0_19 = arith.constant 0 : index
      %27 = vector.load %arg6[%c0_18, %c0_19] : memref<1x128xf32, #tpu.memory_space<vmem>>, vector<1x128xf32>
      %28 = vector.broadcast %27 : vector<1x128xf32> to vector<8x128xf32>
      %29 = arith.addf %26, %28 : vector<8x128xf32>
      %c0_20 = arith.constant 0 : index
      %c0_21 = arith.constant 0 : index
      %30 = vector.load %arg7[%c0_20, %c0_21] : memref<8x128xf32, #tpu.memory_space<vmem>>, vector<8x128xf32>
      tpu.vector_store %arg7[%c0_20, %c0_21], %29 {strides = array<i32>} : memref<8x128xf32, #tpu.memory_space<vmem>>, vector<8x128xf32>,
    } else {
    }
    return
  }
  func.func @transform_0(%arg0: i32, %arg1: i32) -> (i32, i32) {
    %c0_i32 = arith.constant 0 : i32
    %c0_i32_0 = arith.constant 0 : i32
    return %arg0, %c0_i32 : i32, i32
  }
  func.func @transform_1(%arg0: i32, %arg1: i32) -> (i32, i32) {
    %c0_i32 = arith.constant 0 : i32
    %c0_i32_0 = arith.constant 0 : i32
    return %c0_i32, %arg1 : i32, i32
  }
  func.func @transform_2(%arg0: i32, %arg1: i32) -> (i32, i32) {
    %c0_i32 = arith.constant 0 : i32
    %c0_i32_0 = arith.constant 0 : i32
    return %c0_i32, %arg1 : i32, i32
  }
  func.func @transform_3(%arg0: i32, %arg1: i32) -> (i32, i32) {
    %c0_i32 = arith.constant 0 : i32
    %c0_i32_0 = arith.constant 0 : i32
    return %arg1, %c0_i32 : i32, i32
  }
  func.func @transform_4(%arg0: i32, %arg1: i32) -> (i32, i32) {
    %c0_i32 = arith.constant 0 : i32
    %c0_i32_0 = arith.constant 0 : i32
    %c0_i32_1 = arith.constant 0 : i32
    return %c0_i32, %c0_i32_0 : i32, i32
  }
  func.func @transform_5(%arg0: i32, %arg1: i32) -> (i32, i32) {
    %c0_i32 = arith.constant 0 : i32
    %c0_i32_0 = arith.constant 0 : i32
    return %arg0, %c0_i32 : i32, i32
  }
}

</mosaic_0001>

<llo_original>
// kernel: swiglu_fused.1
$region0: #{swiglu_fused.1}
  #allocation0 [shape = 'u32[]', space=smem, size = 0x4, offset = 0x4, fixed_abs, tag = 'smem constant byte address 0x4 - core index']
  #allocation1 [shape = 'u32[144,128]{1,0:T(1,128)}', space=vmem, size = 0x12000, scoped, tag = 'internal scratch']
  #allocation2 [shape = 'f32[8,128]{1,0:T(8,128)}', space=vmem, size = 0x1000, scoped, tag = 'scratch operand']
  %s0 = inlined_call_operand.hbm [shape: f32[16,32], index: 0, kind: input, shape index: {}]
  %s1 = inlined_call_operand.hbm [shape: f32[32,256], index: 1, kind: input, shape index: {}]
  %s2 = inlined_call_operand.vmem [shape: f32[1,256], index: 2, kind: input, shape index: {}]
  %s3 = inlined_call_operand.hbm [shape: f32[128,128], index: 3, kind: input, shape index: {}]
  %s4 = inlined_call_operand.vmem [shape: f32[1,128], index: 4, kind: input, shape index: {}]
  %s5 = inlined_call_operand.vmem [shape: f32[16,128], index: 5, kind: output, shape index: {}]
  %s6 = sld [smem:[#allocation0]]
  $region73: #{swiglu_fused.1} parent=0
    _
  %s8 = ssub.s32 1, %s6
  %s9 = scalar_select 0, %s8, %s6
  $region1: #{swiglu_fused.1} parent=0
    #allocation3 [shape = 'u8[8192]{0}', space=vmem, size = 0x2000, scoped, tag = 'input window, operand 0']
    #allocation4 [shape = 's32[2]{0}', space=sflag, size = 0x8, scoped, tag = 'scoped memory for swiglu_fused.1']
    #allocation5 [shape = 'u8[32768]{0}', space=vmem, size = 0x8000, scoped, tag = 'input window, operand 1, single buffered']
    #allocation6 [shape = 's32[1]{0}', space=sflag, size = 0x4, scoped, tag = 'scoped memory for swiglu_fused.1']
    #allocation7 [shape = 'u8[65536]{0}', space=vmem, size = 0x10000, scoped, tag = 'input window, operand 3, single buffered']
    %10 = vsyncpa [#allocation4], 0
    %s11 = scalar_lea.sflag [#allocation4], 1
    %12 = vsyncpa %s11, 0
    %13 = vsyncpa [#allocation6], 0
    loop: start=0, step=1, limit=4
    $region2: #{swiglu_fused.1} parent=1 // loop_pre_header
      _
    $region3: #{swiglu_fused.1} parent=1 // loop_header
      %s15 = sphi 0, %s19
      %p16 = scmp.ge.s32.totalorder %s15, 4
      %s22 = sphi 0, %s34
      %s23 = sphi 0, %s30
      %s24 = sphi 0, %s22
      %s25 = sphi 0, %s23
      %s26 = sphi 0, %s24
      %s27 = sphi 0, %s25
      %s37 = sphi 0, %s39
      %s40 = sphi 0, %s37
      %s41 = sphi 0, %s40
      %s57 = sphi 0, %s41
      %s63 = sphi 0, %s65
      %s66 = sphi 0, %s63
      %s67 = sphi 0, %s66
      %s83 = sphi 0, %s67
      %s89 = sphi 0, %s91
      %s92 = sphi 0, %s89
      %s93 = sphi 0, %s92
      %s109 = sphi 0, %s93
      %s115 = sphi 0, %s117
      %s118 = sphi 0, %s115
      %s119 = sphi 0, %s118
      %s135 = sphi 0, %s119
      %s139 = sphi 0, %s139
      %s141 = sphi 0, %s139
      %s142 = sphi 0, %s141
      %s156 = sphi 0, %s142
      %s162 = sphi 0, %s164
      %s165 = sphi 0, %s162
      %s166 = sphi 0, %s165
      %s182 = sphi 0, %s166
    $region4: #{swiglu_fused.1} parent=1 // loop_header_branch
      %18 = sbr.rel (%p16) target = $region8
    $region5: #{swiglu_fused.1} parent=1 // loop_body
      %s20 = ssub.s32 %s15, 1
      %s21 = ssub.s32 %s15, 2
      %s28 = sadd.s32 1, %s23
      %p29 = scmp.ge.s32.totalorder %s28, 1
      %s30 = scalar_select %p29, 0, %s28
      %s31 = sadd.s32 1, %s22
      %s32 = scalar_select %p29, %s31, %s22
      %p33 = scmp.ge.s32.totalorder %s32, 2
      %s34 = scalar_select %p33, 0, %s32
      %s35 = ssub.s32 %s22, %s34
      %p36 = scmp.eq.s32.totalorder %s35, 0
      %s38 = sadd.s32 %s37, 1
      %s39 = scalar_select %p36, %s37, %s38
      %p42 = pneg %p36
      %p43 = scmp.eq.s32.totalorder %s15, 1
      %p44 = por %p42, %p43
      %p45 = scmp.ne.s32.totalorder %s37, %s40
      %p46 = scmp.eq.s32.totalorder %s15, 0
      %p47 = por %p45, %p46
      %p48 = scmp.ne.s32.totalorder %s37, %s40
      %p49 = scmp.eq.s32.totalorder %s20, 1
      %p50 = por %p48, %p49
      %p51 = scmp.ne.s32.totalorder %s40, %s41
      %p52 = scmp.eq.s32.totalorder %s20, 0
      %p53 = por %p51, %p52
      %p54 = scmp.ne.s32.totalorder %s40, %s41
      %p55 = scmp.eq.s32.totalorder %s21, 1
      %p56 = por %p54, %p55
      %p58 = scmp.ne.s32.totalorder %s41, %s57
      %p59 = scmp.eq.s32.totalorder %s21, 0
      %p60 = por %p58, %p59
      %s61 = ssub.s32 %s23, %s30
      %p62 = scmp.eq.s32.totalorder %s61, 0
      %s64 = sadd.s32 %s63, 1
      %s65 = scalar_select %p62, %s63, %s64
      %p68 = pneg %p62
      %p69 = scmp.eq.s32.totalorder %s15, 1
      %p70 = por %p68, %p69
      %p71 = scmp.ne.s32.totalorder %s63, %s66
      %p72 = scmp.eq.s32.totalorder %s15, 0
      %p73 = por %p71, %p72
      %p74 = scmp.ne.s32.totalorder %s63, %s66
      %p75 = scmp.eq.s32.totalorder %s20, 1
      %p76 = por %p74, %p75
      %p77 = scmp.ne.s32.totalorder %s66, %s67
      %p78 = scmp.eq.s32.totalorder %s20, 0
      %p79 = por %p77, %p78
      %p80 = scmp.ne.s32.totalorder %s66, %s67
      %p81 = scmp.eq.s32.totalorder %s21, 1
      %p82 = por %p80, %p81
      %p84 = scmp.ne.s32.totalorder %s67, %s83
      %p85 = scmp.eq.s32.totalorder %s21, 0
      %p86 = por %p84, %p85
      %s87 = ssub.s32 %s23, %s30
      %p88 = scmp.eq.s32.totalorder %s87, 0
      %s90 = sadd.s32 %s89, 1
      %s91 = scalar_select %p88, %s89, %s90
      %p94 = pneg %p88
      %p95 = scmp.eq.s32.totalorder %s15, 1
      %p96 = por %p94, %p95
      %p97 = scmp.ne.s32.totalorder %s89, %s92
      %p98 = scmp.eq.s32.totalorder %s15, 0
      %p99 = por %p97, %p98
      %p100 = scmp.ne.s32.totalorder %s89, %s92
      %p101 = scmp.eq.s32.totalorder %s20, 1
      %p102 = por %p100, %p101
      %p103 = scmp.ne.s32.totalorder %s92, %s93
      %p104 = scmp.eq.s32.totalorder %s20, 0
      %p105 = por %p103, %p104
      %p106 = scmp.ne.s32.totalorder %s92, %s93
      %p107 = scmp.eq.s32.totalorder %s21, 1
      %p108 = por %p106, %p107
      %p110 = scmp.ne.s32.totalorder %s93, %s109
      %p111 = scmp.eq.s32.totalorder %s21, 0
      %p112 = por %p110, %p111
      %s113 = ssub.s32 %s23, %s30
      %p114 = scmp.eq.s32.totalorder %s113, 0
      %s116 = sadd.s32 %s115, 1
      %s117 = scalar_select %p114, %s115, %s116
      %p120 = pneg %p114
      %p121 = scmp.eq.s32.totalorder %s15, 1
      %p122 = por %p120, %p121
      %p123 = scmp.ne.s32.totalorder %s115, %s118
      %p124 = scmp.eq.s32.totalorder %s15, 0
      %p125 = por %p123, %p124
      %p126 = scmp.ne.s32.totalorder %s115, %s118
      %p127 = scmp.eq.s32.totalorder %s20, 1
      %p128 = por %p126, %p127
      %p129 = scmp.ne.s32.totalorder %s118, %s119
      %p130 = scmp.eq.s32.totalorder %s20, 0
      %p131 = por %p129, %p130
      %p132 = scmp.ne.s32.totalorder %s118, %s119
      %p133 = scmp.eq.s32.totalorder %s21, 1
      %p134 = por %p132, %p133
      %p136 = scmp.ne.s32.totalorder %s119, %s135
      %p137 = scmp.eq.s32.totalorder %s21, 0
      %p138 = por %p136, %p137
      %s140 = sadd.s32 %s139, 1
      %p143 = scmp.eq.s32.totalorder %s15, 1
      %p144 = scmp.ne.s32.totalorder %s139, %s141
      %p145 = scmp.eq.s32.totalorder %s15, 0
      %p146 = por %p144, %p145
      %p147 = scmp.ne.s32.totalorder %s139, %s141
      %p148 = scmp.eq.s32.totalorder %s20, 1
      %p149 = por %p147, %p148
      %p150 = scmp.ne.s32.totalorder %s141, %s142
      %p151 = scmp.eq.s32.totalorder %s20, 0
      %p152 = por %p150, %p151
      %p153 = scmp.ne.s32.totalorder %s141, %s142
      %p154 = scmp.eq.s32.totalorder %s21, 1
      %p155 = por %p153, %p154
      %p157 = scmp.ne.s32.totalorder %s142, %s156
      %p158 = scmp.eq.s32.totalorder %s21, 0
      %p159 = por %p157, %p158
      %s160 = ssub.s32 %s22, %s34
      %p161 = scmp.eq.s32.totalorder %s160, 0
      %s163 = sadd.s32 %s162, 1
      %s164 = scalar_select %p161, %s162, %s163
      %p167 = pneg %p161
      %p168 = scmp.eq.s32.totalorder %s15, 1
      %p169 = por %p167, %p168
      %p170 = scmp.ne.s32.totalorder %s162, %s165
      %p171 = scmp.eq.s32.totalorder %s15, 0
      %p172 = por %p170, %p171
      %p173 = scmp.ne.s32.totalorder %s162, %s165
      %p174 = scmp.eq.s32.totalorder %s20, 1
      %p175 = por %p173, %p174
      %p176 = scmp.ne.s32.totalorder %s165, %s166
      %p177 = scmp.eq.s32.totalorder %s20, 0
      %p178 = por %p176, %p177
      %p179 = scmp.ne.s32.totalorder %s165, %s166
      %p180 = scmp.eq.s32.totalorder %s21, 1
      %p181 = por %p179, %p180
      %p183 = scmp.ne.s32.totalorder %s166, %s182
      %p184 = scmp.eq.s32.totalorder %s21, 0
      %p185 = por %p183, %p184
      %p186 = scmp.le.s32.totalorder 1, %s15
      %p187 = scmp.lt.s32.totalorder %s15, 3
      %p188 = pnand %p186, %p187
      %p189 = pneg %p188
      // Predicated region
      $region9: #{swiglu_fused.1} parent=5 // pred_check
        _
      $region10: #{swiglu_fused.1} parent=5 // pred_check_branch
        %191 = sbr.rel (%p188) target = $region12
      $region11: #{swiglu_fused.1} parent=5 // pred_region
        %s192 = ssub.s32 %s15, 1
        // Predicated region
        $region13: #{swiglu_fused.1} parent=11 // pred_check
          %p193 = pneg %p79
        $region14: #{swiglu_fused.1} parent=11 // pred_check_branch
          %195 = sbr.rel (%p193) target = $region16
        $region15: #{swiglu_fused.1} parent=11 // pred_region
          %s196 = smul.u32 2, %s25
          %s198 = ssub.s32 1024, 1024
          %199 = vsyncadd [#allocation6], %s198
          %s200 = smul.addr %s196, 128
          %s201 = scalar_lea.hbm %s1, %s200
          %s202 = sshll.u32 [#allocation5], 4
          %s203 = int_to_ptr.vmem [resolvable:$true] %s202
          %208 = dma.hbm_to_vmem [thread:$0]  %s201, 1024, %s203, [#allocation6], 256, 256, 16
        $region16: #{swiglu_fused.1} parent=11 // pred_fallthru
          _
        // Predicated region
        $region17: #{swiglu_fused.1} parent=11 // pred_check
          %p209 = pneg %p105
        $region18: #{swiglu_fused.1} parent=11 // pred_check_branch
          %211 = sbr.rel (%p209) target = $region20
        $region19: #{swiglu_fused.1} parent=11 // pred_region
          %s212 = smul.u32 2, %s25
          %p213 = scmp.lt.s32.totalorder %s212, 1
          %s214 = scalar_select %p213, %s212, 1
          %s215 = scalar_lea.vmem %s2, %s214
          %s216 = smul.u32 2, %s25
        $region20: #{swiglu_fused.1} parent=11 // pred_fallthru
          _
        // Predicated region
        $region21: #{swiglu_fused.1} parent=11 // pred_check
          %p217 = pneg %p131
        $region22: #{swiglu_fused.1} parent=11 // pred_check_branch
          %219 = sbr.rel (%p217) target = $region24
        $region23: #{swiglu_fused.1} parent=11 // pred_region
          %s220 = smul.u32 16, %s25
          %s222 = ssub.s32 2048, 2048
          %223 = vsyncadd [#allocation6], %s222
          %s224 = smul.addr %s220, 128
          %s225 = scalar_lea.hbm %s3, %s224
          %s226 = sshll.u32 [#allocation7], 4
          %s227 = int_to_ptr.vmem [resolvable:$true] %s226
          %232 = dma.hbm_to_vmem [thread:$0]  %s225, 2048, %s227, [#allocation6], 128, 128, 8
        $region24: #{swiglu_fused.1} parent=11 // pred_fallthru
          _
        // Predicated region
        $region25: #{swiglu_fused.1} parent=11 // pred_check
          %p233 = pneg %p152
        $region26: #{swiglu_fused.1} parent=11 // pred_check_branch
          %235 = sbr.rel (%p233) target = $region28
        $region27: #{swiglu_fused.1} parent=11 // pred_region
          _
        $region28: #{swiglu_fused.1} parent=11 // pred_fallthru
          _
      $region12: #{swiglu_fused.1} parent=5 // pred_fallthru
        _
      %p236 = scmp.lt.s32.totalorder %s15, 2
      // Predicated region
      $region29: #{swiglu_fused.1} parent=5 // pred_check
        %p237 = pneg %p236
      $region30: #{swiglu_fused.1} parent=5 // pred_check_branch
        %239 = sbr.rel (%p237) target = $region32
      $region31: #{swiglu_fused.1} parent=5 // pred_region
        // Predicated region
        $region33: #{swiglu_fused.1} parent=31 // pred_check
          %p240 = pneg %p47
        $region34: #{swiglu_fused.1} parent=31 // pred_check_branch
          %242 = sbr.rel (%p240) target = $region36
        $region35: #{swiglu_fused.1} parent=31 // pred_region
          %s243 = sand.u32 %s37, 1
          %s244 = scalar_lea.sflag [#allocation4], %s243
          %s245 = sand.u32 %s37, 1
          %s246 = smul.addr %s245, 8
          %s247 = scalar_lea.vmem [#allocation3], %s246
          %s249 = ssub.s32 128, 128
          %250 = vsyncadd %s244, %s249
          %s251 = smul.addr %s22, 128
          %s252 = scalar_lea.hbm %s0, %s251
          %s254 = sshll.u32 %s247, 4
          %s255 = int_to_ptr.vmem [resolvable:$true] %s254
          %257 = dma.hbm_to_vmem [thread:$0]  %s252, 128, %s255, %s244
        $region36: #{swiglu_fused.1} parent=31 // pred_fallthru
          _
      $region32: #{swiglu_fused.1} parent=5 // pred_fallthru
        _
      %p258 = scmp.le.s32.totalorder 1, %s15
      %p259 = scmp.lt.s32.totalorder %s15, 3
      %p260 = pnand %p258, %p259
      %p261 = pneg %p260
      // Predicated region
      $region37: #{swiglu_fused.1} parent=5 // pred_check
        _
      $region38: #{swiglu_fused.1} parent=5 // pred_check_branch
        %263 = sbr.rel (%p260) target = $region40
      $region39: #{swiglu_fused.1} parent=5 // pred_region
        %s264 = ssub.s32 %s15, 1
        %s265 = sand.u32 %s40, 1
        %s266 = scalar_lea.sflag [#allocation4], %s265
        %s267 = sand.u32 %s40, 1
        %s268 = smul.addr %s267, 8
        %s269 = scalar_lea.vmem [#allocation3], %s268
        // Predicated region
        $region41: #{swiglu_fused.1} parent=39 // pred_check
          %p270 = pneg %p53
        $region42: #{swiglu_fused.1} parent=39 // pred_check_branch
          %272 = sbr.rel (%p270) target = $region44
        $region43: #{swiglu_fused.1} parent=39 // pred_region
          %273 = dma.done %s266, 128
        $region44: #{swiglu_fused.1} parent=39 // pred_fallthru
          _
        // Predicated region
        $region45: #{swiglu_fused.1} parent=39 // pred_check
          %p274 = pneg %p79
        $region46: #{swiglu_fused.1} parent=39 // pred_check_branch
          %276 = sbr.rel (%p274) target = $region48
        $region47: #{swiglu_fused.1} parent=39 // pred_region
          %277 = dma.done [#allocation6], 1024
        $region48: #{swiglu_fused.1} parent=39 // pred_fallthru
          _
        // Predicated region
        $region49: #{swiglu_fused.1} parent=39 // pred_check
          %p278 = pneg %p131
        $region50: #{swiglu_fused.1} parent=39 // pred_check_branch
          %280 = sbr.rel (%p278) target = $region52
        $region51: #{swiglu_fused.1} parent=39 // pred_region
          %281 = dma.done [#allocation6], 2048
        $region52: #{swiglu_fused.1} parent=39 // pred_fallthru
          _
        %s282 = sand.u32 %s40, 1
        %s283 = scalar_lea.sflag [#allocation4], %s282
        %s284 = sand.u32 %s40, 1
        %s285 = smul.addr %s284, 8
        %s286 = scalar_lea.vmem [#allocation3], %s285
        %p287 = pneg %p53
        %p288 = pneg %p50
        %p289 = pneg %p79
        %p290 = pneg %p76
        %s291 = smul.u32 2, %s25
        %p292 = scmp.lt.s32.totalorder %s291, 1
        %s293 = scalar_select %p292, %s291, 1
        %s294 = scalar_lea.vmem %s2, %s293
        %p295 = pneg %p105
        %p296 = pneg %p102
        %p297 = pneg %p131
        %p298 = pneg %p128
        %p299 = pneg %p152
        %p300 = pneg %p149
        %p301 = pneg %p178
        %p302 = pneg %p175
        %p303 = scmp.lt.s32.totalorder %s24, 1
        %s304 = scalar_select %p303, %s24, 1
        %s305 = smul.addr %s304, 8
        %s306 = scalar_lea.vmem %s5, %s305
        %s307 = smul.u32 2, %s25
        %s308 = smul.u32 2, %s25
        %p309 = scmp.lt.s32.totalorder %s308, 1
        %s310 = scalar_select %p309, %s308, 1
        %s311 = scalar_lea.vmem %s2, %s310
        %s312 = smul.u32 2, %s25
        %s313 = smul.u32 16, %s25
        %p314 = scmp.lt.s32.totalorder %s24, 1
        %s315 = scalar_select %p314, %s24, 1
        %s316 = smul.addr %s315, 8
        %s317 = scalar_lea.vmem %s5, %s316
        %p318 = scmp.eq.s32.totalorder %s25, 0
        // Predicated region
        $region53: #{swiglu_fused.1} parent=39 // pred_check
          %p319 = pneg %p318
        $region54: #{swiglu_fused.1} parent=39 // pred_check_branch
          %321 = sbr.rel (%p319) target = $region56
        $region55: #{swiglu_fused.1} parent=39 // pred_region
          %322 = vst [vmem:[#allocation2] sm:$0xff] 0.0
        $region56: #{swiglu_fused.1} parent=39 // pred_fallthru
          _
        %v323 = vld [vmem:[%s269] sm:$0xff]
        %v324 = vld [vmem:[#allocation5] sm:$0xff]
        %v325 = vld [vmem:[#allocation5 + $0x8] sm:$0xff]
        %v326 = vld [vmem:[#allocation5 + $0x10] sm:$0xff]
        %v327 = vld [vmem:[#allocation5 + $0x18] sm:$0xff]
        %v328 = vld [vmem:[#allocation5 + $0x20] sm:$0xff]
        %v329 = vld [vmem:[#allocation5 + $0x28] sm:$0xff]
        %v330 = vld [vmem:[#allocation5 + $0x30] sm:$0xff]
        %v331 = vld [vmem:[#allocation5 + $0x38] sm:$0xff]
        %v332 = vld [vmem:[%s311] sm:$0x3]
        %v334 = vlaneseq
        %v335 = vshrl.u32 %v334, 7
        %v336 = vsub.s32 0, %v335
        %v337 = vrot.slane %v332, %v336
        %v338 = vlaneseq
        %v339 = vshrl.u32 %v338, 7
        %v340 = vsub.s32 1, %v339
        %v341 = vrot.slane %v332, %v340
        %vm344 = vcmask 261120
        %v346 = vsel %vm344, %v323, 0
        %348 = vmatprep.subr.mxu0 0.0
        %349 = vmatpush1.msra.mxu0 0.0
        %350 = vmatprep.subr.mxu0 0.0
        %351 = vmatpush1.msra.mxu0 0.0
        %352 = vmatprep.subr.mxu0 0.0
        %353 = vmatpush1.msra.mxu0 0.0
        %354 = vmatprep.subr.mxu0 0.0
        %355 = vmatpush1.msra.mxu0 0.0
        %356 = vmatprep.subr.mxu0 0.0
        %357 = vmatpush1.msra.mxu0 0.0
        %358 = vmatprep.subr.mxu0 0.0
        %359 = vmatpush1.msra.mxu0 0.0
        %360 = vmatprep.subr.mxu0 0.0
        %361 = vmatpush1.msra.mxu0 0.0
        %362 = vmatprep.subr.mxu0 0.0
        %363 = vmatpush1.msra.mxu0 0.0
        %364 = vmatprep.subr.mxu0 0.0
        %365 = vmatpush1.msra.mxu0 0.0
        %366 = vmatprep.subr.mxu0 0.0
        %367 = vmatpush1.msra.mxu0 0.0
        %368 = vmatprep.subr.mxu0 0.0
        %369 = vmatpush1.msra.mxu0 0.0
        %370 = vmatprep.subr.mxu0 0.0
        %371 = vmatpush1.msra.mxu0 0.0
        %372 = vmatprep.subr.mxu0 %v331
        %373 = vmatpush1.msra.mxu0 %v330
        %374 = vmatprep.subr.mxu0 %v329
        %375 = vmatpush1.msra.mxu0 %v328
        %376 = vmatprep.subr.mxu0 %v327
        %377 = vmatpush1.msra.mxu0 %v326
        %378 = vmatprep.subr.mxu0 %v325
        %379 = vmatpush1.msra.mxu0 %v324
        %380 = vmatprep.subr.mxu0 0.0
        %381 = vmatpush2.msra.mxu0 0.0
        %382 = vmatprep.subr.mxu0 0.0
        %383 = vmatpush2.msra.mxu0 0.0
        %384 = vmatprep.subr.mxu0 0.0
        %385 = vmatpush2.msra.mxu0 0.0
        %386 = vmatprep.subr.mxu0 0.0
        %387 = vmatpush2.msra.mxu0 0.0
        %388 = vmatprep.subr.mxu0 0.0
        %389 = vmatpush2.msra.mxu0 0.0
        %390 = vmatprep.subr.mxu0 0.0
        %391 = vmatpush2.msra.mxu0 0.0
        %392 = vmatprep.subr.mxu0 0.0
        %393 = vmatpush2.msra.mxu0 0.0
        %394 = vmatprep.subr.mxu0 0.0
        %395 = vmatpush2.msra.mxu0 0.0
        %396 = vmatprep.subr.mxu0 0.0
        %397 = vmatpush2.msra.mxu0 0.0
        %398 = vmatprep.subr.mxu0 0.0
        %399 = vmatpush2.msra.mxu0 0.0
        %400 = vmatprep.subr.mxu0 0.0
        %401 = vmatpush2.msra.mxu0 0.0
        %402 = vmatprep.subr.mxu0 0.0
        %403 = vmatpush2.msra.mxu0 0.0
        %404 = vmatprep.subr.mxu0 0.0
        %405 = vmatpush2.msra.mxu0 0.0
        %406 = vmatprep.subr.mxu0 0.0
        %407 = vmatpush2.msra.mxu0 0.0
        %408 = vmatprep.subr.mxu0 0.0
        %409 = vmatpush2.msra.mxu0 0.0
        %410 = vmatprep.subr.mxu0 0.0
        %411 = vmatpush2.msra.mxu0 0.0
        %412 = vmatprep.mubr.f32.mxu0 0.0
        %413 = vmatmul.mubr.f32.gmra.mxu0 %v346
        %v414 = vpop.f32.mrf.mxu0
        %v415 = vadd.f32 %v337, %v414
        %v416 = vpop.f32.mrf.mxu0
        %v417 = vadd.f32 %v341, %v416
        %418 = vdwg.mxu0
        %v419 = vxor.u32 %v415, 2147483648
        %v420 = vmul.f32 %v419, 1.442695
        %v421 = vpow.pop %v420
        %v422 = vadd.f32 %v421, 1.0
        %v423 = vrcp.pop %v422
        %v424 = vmul.f32 1.0, %v423
        %v425 = vmul.f32 %v415, %v424
        %v426 = vmul.f32 %v425, %v417
        %v427 = vld [vmem:[#allocation2] sm:$0xff]
        %v428 = vld [vmem:[#allocation7] sm:$0xff]
        %v429 = vld [vmem:[#allocation7 + $0x8] sm:$0xff]
        %v430 = vld [vmem:[#allocation7 + $0x10] sm:$0xff]
        %v431 = vld [vmem:[#allocation7 + $0x18] sm:$0xff]
        %v432 = vld [vmem:[#allocation7 + $0x20] sm:$0xff]
        %v433 = vld [vmem:[#allocation7 + $0x28] sm:$0xff]
        %v434 = vld [vmem:[#allocation7 + $0x30] sm:$0xff]
        %v435 = vld [vmem:[#allocation7 + $0x38] sm:$0xff]
        %v436 = vld [vmem:[#allocation7 + $0x40] sm:$0xff]
        %v437 = vld [vmem:[#allocation7 + $0x48] sm:$0xff]
        %v438 = vld [vmem:[#allocation7 + $0x50] sm:$0xff]
        %v439 = vld [vmem:[#allocation7 + $0x58] sm:$0xff]
        %v440 = vld [vmem:[#allocation7 + $0x60] sm:$0xff]
        %v441 = vld [vmem:[#allocation7 + $0x68] sm:$0xff]
        %v442 = vld [vmem:[#allocation7 + $0x70] sm:$0xff]
        %v443 = vld [vmem:[#allocation7 + $0x78] sm:$0xff]
        %444 = vmatprep.subr.mxu0 0.0
        %445 = vmatpush1.msra.mxu0 %v443
        %446 = vmatprep.subr.mxu0 0.0
        %447 = vmatpush1.msra.mxu0 %v442
        %448 = vmatprep.subr.mxu0 0.0
        %449 = vmatpush1.msra.mxu0 %v441
        %450 = vmatprep.subr.mxu0 0.0
        %451 = vmatpush1.msra.mxu0 %v440
        %452 = vmatprep.subr.mxu0 0.0
        %453 = vmatpush1.msra.mxu0 %v439
        %454 = vmatprep.subr.mxu0 0.0
        %455 = vmatpush1.msra.mxu0 %v438
        %456 = vmatprep.subr.mxu0 0.0
        %457 = vmatpush1.msra.mxu0 %v437
        %458 = vmatprep.subr.mxu0 0.0
        %459 = vmatpush1.msra.mxu0 %v436
        %460 = vmatprep.subr.mxu0 0.0
        %461 = vmatpush1.msra.mxu0 %v435
        %462 = vmatprep.subr.mxu0 0.0
        %463 = vmatpush1.msra.mxu0 %v434
        %464 = vmatprep.subr.mxu0 0.0
        %465 = vmatpush1.msra.mxu0 %v433
        %466 = vmatprep.subr.mxu0 0.0
        %467 = vmatpush1.msra.mxu0 %v432
        %468 = vmatprep.subr.mxu0 0.0
        %469 = vmatpush1.msra.mxu0 %v431
        %470 = vmatprep.subr.mxu0 0.0
        %471 = vmatpush1.msra.mxu0 %v430
        %472 = vmatprep.subr.mxu0 0.0
        %473 = vmatpush1.msra.mxu0 %v429
        %474 = vmatprep.subr.mxu0 0.0
        %475 = vmatpush1.msra.mxu0 %v428
        %476 = vmatprep.subr.mxu0 0.0
        %477 = vmatpush2.msra.mxu0 0.0
        %478 = vmatprep.subr.mxu0 0.0
        %479 = vmatpush2.msra.mxu0 0.0
        %480 = vmatprep.subr.mxu0 0.0
        %481 = vmatpush2.msra.mxu0 0.0
        %482 = vmatprep.subr.mxu0 0.0
        %483 = vmatpush2.msra.mxu0 0.0
        %484 = vmatprep.subr.mxu0 0.0
        %485 = vmatpush2.msra.mxu0 0.0
        %486 = vmatprep.subr.mxu0 0.0
        %487 = vmatpush2.msra.mxu0 0.0
        %488 = vmatprep.subr.mxu0 0.0
        %489 = vmatpush2.msra.mxu0 0.0
        %490 = vmatprep.subr.mxu0 0.0
        %491 = vmatpush2.msra.mxu0 0.0
        %492 = vmatprep.subr.mxu0 0.0
        %493 = vmatpush2.msra.mxu0 0.0
        %494 = vmatprep.subr.mxu0 0.0
        %495 = vmatpush2.msra.mxu0 0.0
        %496 = vmatprep.subr.mxu0 0.0
        %497 = vmatpush2.msra.mxu0 0.0
        %498 = vmatprep.subr.mxu0 0.0
        %499 = vmatpush2.msra.mxu0 0.0
        %500 = vmatprep.subr.mxu0 0.0
        %501 = vmatpush2.msra.mxu0 0.0
        %502 = vmatprep.subr.mxu0 0.0
        %503 = vmatpush2.msra.mxu0 0.0
        %504 = vmatprep.subr.mxu0 0.0
        %505 = vmatpush2.msra.mxu0 0.0
        %506 = vmatprep.subr.mxu0 0.0
        %507 = vmatpush2.msra.mxu0 0.0
        %508 = vmatprep.mubr.f32.mxu0 0.0
        %509 = vmatmul.mubr.f32.gmra.mxu0 %v426
        %v510 = vpop.f32.mrf.mxu0
        %v511 = vadd.f32 0.0, %v510
        %v512 = vpop.f32.mrf.mxu0
        %513 = vdwg.mxu0
        %v514 = vadd.f32 %v427, %v511
        %515 = vst [vmem:[#allocation2] sm:$0xff] %v514
        // Predicated region
        $region57: #{swiglu_fused.1} parent=39 // pred_check
          %p516 = pneg %p318
        $region58: #{swiglu_fused.1} parent=39 // pred_check_branch
          %518 = sbr.rel (%p516) target = $region60
        $region59: #{swiglu_fused.1} parent=39 // pred_region
          %v519 = vld [vmem:[#allocation2] sm:$0xff]
          %v520 = vld [vmem:[%s4] sm:$0x1]
          %v522 = vlaneseq
          %v523 = vshrl.u32 %v522, 7
          %v524 = vsub.s32 0, %v523
          %v525 = vrot.slane %v520, %v524
          %v527 = vadd.f32 %v519, %v525
          %528 = vst [vmem:[%s317] sm:$0xff] %v527
        $region60: #{swiglu_fused.1} parent=39 // pred_fallthru
          _
        %p529 = scmp.lt.s32.totalorder %s24, 1
        %s530 = scalar_select %p529, %s24, 1
        %s531 = smul.addr %s530, 8
        %s532 = scalar_lea.vmem %s5, %s531
        // Predicated region
        $region61: #{swiglu_fused.1} parent=39 // pred_check
          %p533 = pneg %p175
        $region62: #{swiglu_fused.1} parent=39 // pred_check_branch
          %535 = sbr.rel (%p533) target = $region64
        $region63: #{swiglu_fused.1} parent=39 // pred_region
          _
        $region64: #{swiglu_fused.1} parent=39 // pred_fallthru
          _
      $region40: #{swiglu_fused.1} parent=5 // pred_fallthru
        _
      %p536 = scmp.le.s32.totalorder 2, %s15
      // Predicated region
      $region65: #{swiglu_fused.1} parent=5 // pred_check
        %p537 = pneg %p536
      $region66: #{swiglu_fused.1} parent=5 // pred_check_branch
        %539 = sbr.rel (%p537) target = $region68
      $region67: #{swiglu_fused.1} parent=5 // pred_region
        %s540 = ssub.s32 %s15, 2
        // Predicated region
        $region69: #{swiglu_fused.1} parent=67 // pred_check
          %p541 = pneg %p181
        $region70: #{swiglu_fused.1} parent=67 // pred_check_branch
          %543 = sbr.rel (%p541) target = $region72
        $region71: #{swiglu_fused.1} parent=67 // pred_region
          %p544 = scmp.lt.s32.totalorder %s26, 1
          %s545 = scalar_select %p544, %s26, 1
          %s546 = smul.addr %s545, 8
          %s547 = scalar_lea.vmem %s5, %s546
        $region72: #{swiglu_fused.1} parent=67 // pred_fallthru
          _
      $region68: #{swiglu_fused.1} parent=5 // pred_fallthru
        _
    $region6: #{swiglu_fused.1} parent=1 // loop_footer
      %s19 = sadd.s32 1, %s15
    $region7: #{swiglu_fused.1} parent=1 // loop_footer_branch
      %14 = sbr.rel target = $region3
    $region8: #{swiglu_fused.1} parent=1 // loop_exit
      _
    %548 = vsyncpa [#allocation4], 1
    %s549 = scalar_lea.sflag [#allocation4], 1
    %550 = vsyncpa %s549, 1
    %551 = vsyncpa [#allocation6], 1

</llo_original>
